<compile_context>
chip_gen: v6e
topology: v6e:2x2x1
jax: 0.10.0
libtpu: 0.0.40
codegen_flags: <defaults>
</compile_context>

<pallas_src>
import functools
import math
from typing import NamedTuple

import jax
import jax.numpy as jnp
from jax.experimental import pallas as pl
from jax.experimental.pallas import tpu as pltpu

_C1 = math.sqrt(2.0 / math.pi)      # sqrt(2/pi)
_C2 = 0.044715 * _C1                # folded: 0.044715 * sqrt(2/pi)


def _gelu_tanh(x):
    # 0.5*x*(1 + tanh(sqrt(2/pi)*(x + 0.044715*x^3))), constants folded so the
    # inner argument is x*(C1 + C2*x*x) (2 fewer VALU ops per element).
    return 0.5 * x * (1.0 + jnp.tanh(x * (_C1 + _C2 * x * x)))


def _round_up(n, m):
    return ((n + m - 1) // m) * m


def _physical_vmem_bytes():
    try:
        info = pltpu.get_tpu_info()
        v = getattr(info, "vmem_capacity_bytes", None)
        if v:
            return int(v)
    except Exception:
        pass
    return 64 * 1024 * 1024  # conservative fallback (v7x per-TensorCore)


def _maybe_pad(a, shape):
    if tuple(a.shape) == tuple(shape):
        return a
    return jnp.pad(a, [(0, s - d) for d, s in zip(a.shape, shape)])


class FFNPlan(NamedTuple):
    dim: int
    dim_ffn: int
    dim_p: int       # padded model dim (lane / contraction axis)
    dff_p: int       # padded ffn dim
    tm: int          # token tile
    tf: int          # ffn tile
    io_bufs: int     # buffer count for the x/out specs (i-invariant along f)
    vmem_limit: int  # bytes, for CompilerParams.vmem_limit_bytes


def plan_ffn_tiles(M, dim, dim_ffn, x_dtype, w_dtype, *, tm=1024, tf=512):
    """Pick 128/256-aligned tiles that fit the physical VMEM budget."""
    x_bytes = jnp.dtype(x_dtype).itemsize
    w_bytes = jnp.dtype(w_dtype).itemsize

    # Feature dim: 256-aligned for the v6e/v7x 2x256x256 MXU, 128 minimum.
    dim_p = _round_up(dim, 256) if dim > 128 else _round_up(dim, 128)

    # Token tile: large by default (weight-stream amortization), >=16 sublanes
    # (bf16 packing), multiple of 8.
    tm = _round_up(max(tm, 16), 8)
    tm_eff = max(16, min(tm, _round_up(M, 8)))
    if tm_eff >= M >= 512:
        # Megacore: keep >= 2 token tiles so the "parallel" axis feeds 2 TCs.
        tm_eff = max(256, _round_up(-(-M // 2), 8))

    # dim_ffn tile: multiple of 128; prefer one that divides dim_ffn so the ffn
    # axis needs no padding (e.g. dim_ffn=2816 -> tf=256), but don't shrink
    # below tf/2 just to avoid padding.
    tf = _round_up(max(tf, 128), 128)
    tf_eff = min(tf, _round_up(dim_ffn, 128))
    if dim_ffn % tf_eff != 0:
        for cand in (1024, 768, 512, 384, 256, 128):
            if tf_eff // 2 <= cand <= tf_eff and dim_ffn % cand == 0:
                tf_eff = cand
                break

    def vmem_need(tm_e, tf_e, io_bufs):
        return (io_bufs * tm_e * dim_p * 2 * x_bytes   # x + out tiles
                + 2 * dim_p * (2 * tf_e) * w_bytes     # packed [fc1|gate], 2 bufs
                + 2 * tf_e * dim_p * w_bytes           # fc2 slice, 2 bufs
                + tm_e * dim_p * 4)                    # persistent f32 accumulator

    budget = int(_physical_vmem_bytes() * 0.85)
    # Shrink tf first (keeps arithmetic intensity ~tm), then tm.
    while vmem_need(tm_eff, tf_eff, 2) > budget and tf_eff > 256:
        tf_eff = max(256, (tf_eff // 2) // 128 * 128)
    while vmem_need(tm_eff, tf_eff, 2) > budget and tm_eff > 128:
        tm_eff = max(128, _round_up(tm_eff // 2, 8))

    dff_p = _round_up(dim_ffn, tf_eff)
    nf = dff_p // tf_eff
    # x/out blocks are revisited along f -> single-buffer them when nf > 1;
    # keep double-buffering when every grid step changes the token tile.
    io_bufs = 1 if nf > 1 else 2
    vmem_limit = int(min(budget,
                         max(vmem_need(tm_eff, tf_eff, io_bufs) * 3 // 2 + (4 << 20),
                             32 << 20)))
    return FFNPlan(dim, dim_ffn, dim_p, dff_p, tm_eff, tf_eff, io_bufs, vmem_limit)


def pack_ffn_weights(w_gate, w_fc1, w_fc2, plan):
    """Pad + interleave weights ONCE (call at init in a real model, not per fwd).

    Returns
      w_gf: (dim_p, 2*dff_p)  column block f = [ fc1 block f | gate block f ]
      w2  : (dff_p, dim_p)
    Weights are (in, out), i.e. the transpose of torch.nn.Linear.weight.
    """
    dim_p, dff_p, tf = plan.dim_p, plan.dff_p, plan.tf
    wg = _maybe_pad(w_gate, (dim_p, dff_p))
    w1 = _maybe_pad(w_fc1, (dim_p, dff_p))
    w2 = _maybe_pad(w_fc2, (dff_p, dim_p))
    nf = dff_p // tf
    w_gf = jnp.concatenate(
        [w1.reshape(dim_p, nf, tf), wg.reshape(dim_p, nf, tf)], axis=2
    ).reshape(dim_p, nf * 2 * tf)
    return w_gf, w2


def _ffn_kernel(x_ref, wgf_ref, w2_ref, o_ref, acc_ref, *, tf):
    # x_ref  : (tm, dim_p)        token tile (native dtype -> bf16 MXU path)
    # wgf_ref: (dim_p, 2*tf)      packed [fc1 | gate] weight slice
    # w2_ref : (tf, dim_p)        fc2 weight slice
    # o_ref  : (tm, dim_p)        output tile
    # acc_ref: (tm, dim_p) f32    accumulator, persistent across the f axis
    f = pl.program_id(1)

    @pl.when(f == 0)
    def _():
        acc_ref[...] = jnp.zeros_like(acc_ref)

    x = x_ref[...]
    hg = jnp.dot(x, wgf_ref[...], preferred_element_type=jnp.float32)  # (tm, 2*tf)
    hidden = hg[:, :tf] * _gelu_tanh(hg[:, tf:])                       # fc1 * gelu(gate)
    acc_ref[...] += jnp.dot(hidden.astype(w2_ref.dtype), w2_ref[...],
                            preferred_element_type=jnp.float32)

    @pl.when(f == pl.num_programs(1) - 1)
    def _():
        o_ref[...] = acc_ref[...].astype(o_ref.dtype)


def _io_spec(block_shape, index_map, buffers):
    # Single-buffer i-invariant blocks when supported; default double-buffered
    # BlockSpec otherwise (older jax without pipeline_mode).
    if buffers != 2 and hasattr(pl, "Buffered"):
        try:
            return pl.BlockSpec(block_shape, index_map,
                                pipeline_mode=pl.Buffered(buffers))
        except TypeError:
            pass
    return pl.BlockSpec(block_shape, index_map)


def t5_feed_forward_packed(x, w_gf, w2, plan):
    B, L, dim = x.shape
    assert dim == plan.dim
    M = B * L
    tm, tf, dim_p, dff_p = plan.tm, plan.tf, plan.dim_p, plan.dff_p
    m_pad = _round_up(M, tm)
    nf = dff_p // tf

    x2d = _maybe_pad(x.reshape(M, dim), (m_pad, dim_p))

    out2d = pl.pallas_call(
        functools.partial(_ffn_kernel, tf=tf),
        out_shape=jax.ShapeDtypeStruct((m_pad, dim_p), x.dtype),
        grid_spec=pltpu.PrefetchScalarGridSpec(
            num_scalar_prefetch=0,
            grid=(m_pad // tm, nf),
            in_specs=[
                _io_spec((tm, dim_p), lambda i, f: (i, 0), plan.io_bufs),  # x tile
                pl.BlockSpec((dim_p, 2 * tf), lambda i, f: (0, f)),        # [fc1|gate]
                pl.BlockSpec((tf, dim_p), lambda i, f: (f, 0)),            # fc2 slice
            ],
            out_specs=_io_spec((tm, dim_p), lambda i, f: (i, 0), plan.io_bufs),
            scratch_shapes=[pltpu.VMEM((tm, dim_p), jnp.float32)],
        ),
        compiler_params=pltpu.CompilerParams(
            dimension_semantics=("parallel", "arbitrary"),
            vmem_limit_bytes=plan.vmem_limit,
        ),
    )(x2d, w_gf, w2)

    if (m_pad, dim_p) != (M, dim):
        out2d = out2d[:M, :dim]
    return out2d.reshape(B, L, dim)


def t5_feed_forward(x, w_gate, w_fc1, w_fc2, *, tm=1024, tf=512):
    """Convenience wrapper.  In a real model, call plan_ffn_tiles /
    pack_ffn_weights once at init and reuse t5_feed_forward_packed per step."""
    B, L, dim = x.shape
    dim_ffn = w_gate.shape[1]
    assert w_gate.shape == (dim, dim_ffn)
    assert w_fc1.shape == (dim, dim_ffn)
    assert w_fc2.shape == (dim_ffn, dim)
    plan = plan_ffn_tiles(B * L, dim, dim_ffn, x.dtype, w_gate.dtype, tm=tm, tf=tf)
    w_gf, w2 = pack_ffn_weights(w_gate, w_fc1, w_fc2, plan)
    return t5_feed_forward_packed(x, w_gf, w2, plan)


def _reference(x, w_gate, w_fc1, w_fc2):
    hp = jax.lax.Precision.HIGHEST
    xf = x.astype(jnp.float32)
    g = jnp.dot(xf, w_gate.astype(jnp.float32), precision=hp)
    h = jnp.dot(xf, w_fc1.astype(jnp.float32), precision=hp)
    hidden = h * _gelu_tanh(g)
    return jnp.dot(hidden, w_fc2.astype(jnp.float32), precision=hp).astype(x.dtype)


if __name__ == "__main__":
    # Small shapes consistent with the module: batch=2, seq=8, dim=32, dim_ffn=128.
    B, L, dim, dim_ffn = 2, 8, 32, 128

    key = jax.random.PRNGKey(0)
    kx, kg, k1, k2 = jax.random.split(key, 4)
    x = jax.random.normal(kx, (B, L, dim), dtype=jnp.float32)
    # Weights stored as (in, out) == torch Linear weight.T, deterministic init.
    w_gate = jax.random.normal(kg, (dim, dim_ffn), dtype=jnp.float32) / math.sqrt(dim)
    w_fc1 = jax.random.normal(k1, (dim, dim_ffn), dtype=jnp.float32) / math.sqrt(dim)
    w_fc2 = jax.random.normal(k2, (dim_ffn, dim), dtype=jnp.float32) / math.sqrt(dim_ffn)

    out = jax.block_until_ready(t5_feed_forward(x, w_gate, w_fc1, w_fc2))
    ref = _reference(x, w_gate, w_fc1, w_fc2)
    assert out.shape == (B, L, dim)
    assert jnp.allclose(out, ref, rtol=2e-2, atol=2e-2), (
        "f32 mismatch: max abs err = %f" % float(jnp.max(jnp.abs(out - ref))))

    # bf16 path (native-dtype MXU): numerically validated with loose tolerances
    # (the only deviation from the f32 reference is bf16 rounding).
    xb, wgb, w1b, w2b = (a.astype(jnp.bfloat16) for a in (x, w_gate, w_fc1, w_fc2))
    out_b = jax.block_until_ready(t5_feed_forward(xb, wgb, w1b, w2b))
    ref_b = _reference(xb, wgb, w1b, w2b)
    assert out_b.shape == (B, L, dim)
    assert jnp.allclose(out_b.astype(jnp.float32), ref_b.astype(jnp.float32),
                        rtol=1e-1, atol=1e-1), "bf16 mismatch"

    print("KERNEL_OK")
</pallas_src>

<mosaic_0001>
module attributes {stable_mosaic.version = 11 : i64} {
  func.func @_ffn_kernel(%arg0: i32, %arg1: i32, %arg2: memref<16x128xf32, #tpu.memory_space<vmem>>, %arg3: memref<128x256xf32, #tpu.memory_space<vmem>>, %arg4: memref<128x128xf32, #tpu.memory_space<vmem>>, %arg5: memref<16x128xf32, #tpu.memory_space<vmem>>, %arg6: memref<16x128xf32, #tpu.memory_space<vmem>>) attributes {dimension_semantics = [#tpu.dimension_semantics<parallel>, #tpu.dimension_semantics<arbitrary>], iteration_bounds = array<i64: 1, 1>, scalar_prefetch = 0 : i64, scratch_operands = 1 : i64, tpu.core_type = #tpu.core_type<tc>, window_params = [{transform_indices = @transform_0, window_bounds = array<i64: 16, 128>}, {transform_indices = @transform_1, window_bounds = array<i64: 128, 256>}, {transform_indices = @transform_2, window_bounds = array<i64: 128, 128>}, {transform_indices = @transform_3, window_bounds = array<i64: 16, 128>}]} {
    %c0_i32 = arith.constant 0 : i32
    %0 = arith.cmpi eq, %arg1, %c0_i32 : i32
    %1 = arith.extui %0 : i1 to i32
    %c0_i32_0 = arith.constant 0 : i32
    %2 = arith.cmpi ne, %1, %c0_i32_0 : i32
    scf.if %2 {
      %cst_17 = arith.constant 0.000000e+00 : f32
      %29 = vector.broadcast %cst_17 : f32 to vector<16x128xf32>
      %c0_18 = arith.constant 0 : index
      %c0_19 = arith.constant 0 : index
      %30 = vector.load %arg6[%c0_18, %c0_19] : memref<16x128xf32, #tpu.memory_space<vmem>>, vector<16x128xf32>
      tpu.vector_store %arg6[%c0_18, %c0_19], %29 {strides = array<i32>} : memref<16x128xf32, #tpu.memory_space<vmem>>, vector<16x128xf32>,
    } else {
    }
    %c0 = arith.constant 0 : index
    %c0_1 = arith.constant 0 : index
    %3 = vector.load %arg2[%c0, %c0_1] : memref<16x128xf32, #tpu.memory_space<vmem>>, vector<16x128xf32>
    %c0_2 = arith.constant 0 : index
    %c0_3 = arith.constant 0 : index
    %4 = vector.load %arg3[%c0_2, %c0_3] : memref<128x256xf32, #tpu.memory_space<vmem>>, vector<128x256xf32>
    %cst = arith.constant dense<0.000000e+00> : vector<16x256xf32>
    %5 = tpu.matmul %3, %4, %cst {dimension_numbers = #tpu.dot_dimension_numbers<[1], [0], [0], [1], [0, 0, 1, 1], [], []>} : vector<16x128xf32>, vector<128x256xf32>, vector<16x256xf32> -> vector<16x256xf32>
    %6 = vector.extract_strided_slice %5 {offsets = [0, 0], sizes = [16, 128], strides = [1, 1]} : vector<16x256xf32> to vector<16x128xf32>
    %7 = vector.extract_strided_slice %5 {offsets = [0, 128], sizes = [16, 128], strides = [1, 1]} : vector<16x256xf32> to vector<16x128xf32>
    %cst_4 = arith.constant 5.000000e-01 : f32
    %8 = vector.broadcast %cst_4 : f32 to vector<16x128xf32>
    %9 = arith.mulf %8, %7 : vector<16x128xf32>
    %cst_5 = arith.constant 0.0356774069 : f32
    %10 = vector.broadcast %cst_5 : f32 to vector<16x128xf32>
    %11 = arith.mulf %10, %7 : vector<16x128xf32>
    %12 = arith.mulf %11, %7 : vector<16x128xf32>
    %cst_6 = arith.constant 0.797884583 : f32
    %13 = vector.broadcast %cst_6 : f32 to vector<16x128xf32>
    %14 = arith.addf %13, %12 : vector<16x128xf32>
    %15 = arith.mulf %7, %14 : vector<16x128xf32>
    %16 = math.tanh %15 : vector<16x128xf32>
    %cst_7 = arith.constant 1.000000e+00 : f32
    %17 = vector.broadcast %cst_7 : f32 to vector<16x128xf32>
    %18 = arith.addf %17, %16 : vector<16x128xf32>
    %19 = arith.mulf %9, %18 : vector<16x128xf32>
    %20 = arith.mulf %6, %19 : vector<16x128xf32>
    %c0_8 = arith.constant 0 : index
    %c0_9 = arith.constant 0 : index
    %21 = vector.load %arg6[%c0_8, %c0_9] : memref<16x128xf32, #tpu.memory_space<vmem>>, vector<16x128xf32>
    %c0_10 = arith.constant 0 : index
    %c0_11 = arith.constant 0 : index
    %22 = vector.load %arg4[%c0_10, %c0_11] : memref<128x128xf32, #tpu.memory_space<vmem>>, vector<128x128xf32>
    %cst_12 = arith.constant dense<0.000000e+00> : vector<16x128xf32>
    %23 = tpu.matmul %20, %22, %cst_12 {dimension_numbers = #tpu.dot_dimension_numbers<[1], [0], [0], [1], [0, 0, 1, 1], [], []>} : vector<16x128xf32>, vector<128x128xf32>, vector<16x128xf32> -> vector<16x128xf32>
    %24 = arith.addf %21, %23 : vector<16x128xf32>
    %c0_13 = arith.constant 0 : index
    %c0_14 = arith.constant 0 : index
    %25 = vector.load %arg6[%c0_13, %c0_14] : memref<16x128xf32, #tpu.memory_space<vmem>>, vector<16x128xf32>
    tpu.vector_store %arg6[%c0_13, %c0_14], %24 {strides = array<i32>} : memref<16x128xf32, #tpu.memory_space<vmem>>, vector<16x128xf32>,
    %c0_i32_15 = arith.constant 0 : i32
    %26 = arith.cmpi eq, %arg1, %c0_i32_15 : i32
    %27 = arith.extui %26 : i1 to i32
    %c0_i32_16 = arith.constant 0 : i32
    %28 = arith.cmpi ne, %27, %c0_i32_16 : i32
    scf.if %28 {
      %c0_17 = arith.constant 0 : index
      %c0_18 = arith.constant 0 : index
      %29 = vector.load %arg6[%c0_17, %c0_18] : memref<16x128xf32, #tpu.memory_space<vmem>>, vector<16x128xf32>
      %c0_19 = arith.constant 0 : index
      %c0_20 = arith.constant 0 : index
      %30 = vector.load %arg5[%c0_19, %c0_20] : memref<16x128xf32, #tpu.memory_space<vmem>>, vector<16x128xf32>
      tpu.vector_store %arg5[%c0_19, %c0_20], %29 {strides = array<i32>} : memref<16x128xf32, #tpu.memory_space<vmem>>, vector<16x128xf32>,
    } else {
    }
    return
  }
  func.func @transform_0(%arg0: i32, %arg1: i32) -> (i32, i32) {
    %c0_i32 = arith.constant 0 : i32
    %c0_i32_0 = arith.constant 0 : i32
    return %arg0, %c0_i32 : i32, i32
  }
  func.func @transform_1(%arg0: i32, %arg1: i32) -> (i32, i32) {
    %c0_i32 = arith.constant 0 : i32
    %c0_i32_0 = arith.constant 0 : i32
    return %c0_i32, %arg1 : i32, i32
  }
  func.func @transform_2(%arg0: i32, %arg1: i32) -> (i32, i32) {
    %c0_i32 = arith.constant 0 : i32
    %c0_i32_0 = arith.constant 0 : i32
    return %arg1, %c0_i32 : i32, i32
  }
  func.func @transform_3(%arg0: i32, %arg1: i32) -> (i32, i32) {
    %c0_i32 = arith.constant 0 : i32
    %c0_i32_0 = arith.constant 0 : i32
    return %arg0, %c0_i32 : i32, i32
  }
}

</mosaic_0001>

<llo_original>
// kernel: tpu_custom_call.1
$region0: #{tpu_custom_call.1}
  #allocation0 [shape = 'u32[]', space=smem, size = 0x4, offset = 0x4, fixed_abs, tag = 'smem constant byte address 0x4 - core index']
  #allocation1 [shape = 'u32[144,128]{1,0:T(1,128)}', space=vmem, size = 0x12000, scoped, tag = 'internal scratch']
  #allocation2 [shape = 'f32[16,128]{1,0:T(8,128)}', space=vmem, size = 0x2000, scoped, tag = 'scratch operand']
  %s0 = inlined_call_operand.hbm [shape: f32[16,128], index: 0, kind: input, shape index: {}]
  %s1 = inlined_call_operand.hbm [shape: f32[128,256], index: 1, kind: input, shape index: {}]
  %s2 = inlined_call_operand.hbm [shape: f32[128,128], index: 2, kind: input, shape index: {}]
  %s3 = inlined_call_operand.hbm [shape: f32[16,128], index: 3, kind: output, shape index: {}]
  %s4 = sld [smem:[#allocation0]]
  $region42: #{tpu_custom_call.1} parent=0
    _
  %s6 = ssub.s32 1, %s4
  %s7 = scalar_select 0, %s6, %s4
  $region1: #{tpu_custom_call.1} parent=0
    #allocation3 [shape = 'u8[8192]{0}', space=vmem, size = 0x2000, scoped, tag = 'input window, operand 0, single buffered']
    #allocation4 [shape = 's32[1]{0}', space=sflag, size = 0x4, scoped, tag = 'scoped memory for tpu_custom_call.1']
    #allocation5 [shape = 's32[1]{0}', space=sflag, size = 0x4, scoped, tag = 'scoped memory for tpu_custom_call.1']
    #allocation6 [shape = 'u8[131072]{0}', space=vmem, size = 0x20000, scoped, tag = 'input window, operand 1, single buffered']
    #allocation7 [shape = 's32[1]{0}', space=sflag, size = 0x4, scoped, tag = 'scoped memory for tpu_custom_call.1']
    #allocation8 [shape = 'u8[65536]{0}', space=vmem, size = 0x10000, scoped, tag = 'input window, operand 2, single buffered']
    #allocation9 [shape = 'u8[8192]{0}', space=vmem, size = 0x2000, scoped, tag = 'output window, operand 0, single buffered']
    %8 = vsyncpa [#allocation4], 0
    %9 = vsyncpa [#allocation7], 0
    %10 = vsyncpa [#allocation5], 0
    // Predicated region
    $region2: #{tpu_custom_call.1} parent=1 // pred_check
      _
    $region3: #{tpu_custom_call.1} parent=1 // pred_check_branch
      %12 = sbr.rel (0) target = $region5
    $region4: #{tpu_custom_call.1} parent=1 // pred_region
      %s14 = ssub.s32 256, 256
      %15 = vsyncadd [#allocation4], %s14
      %s16 = sshll.u32 [#allocation3], 4
      %s17 = int_to_ptr.vmem [resolvable:$true] %s16
      %22 = dma.hbm_to_vmem [thread:$0]  %s0, 256, %s17, [#allocation4], 128, 128, 8
    $region5: #{tpu_custom_call.1} parent=1 // pred_fallthru
      _
    // Predicated region
    $region6: #{tpu_custom_call.1} parent=1 // pred_check
      _
    $region7: #{tpu_custom_call.1} parent=1 // pred_check_branch
      %24 = sbr.rel (0) target = $region9
    $region8: #{tpu_custom_call.1} parent=1 // pred_region
      %s26 = ssub.s32 4096, 4096
      %27 = vsyncadd [#allocation7], %s26
      %s28 = sshll.u32 [#allocation6], 4
      %s29 = int_to_ptr.vmem [resolvable:$true] %s28
      %34 = dma.hbm_to_vmem [thread:$0]  %s1, 4096, %s29, [#allocation7], 256, 256, 16
    $region9: #{tpu_custom_call.1} parent=1 // pred_fallthru
      _
    // Predicated region
    $region10: #{tpu_custom_call.1} parent=1 // pred_check
      _
    $region11: #{tpu_custom_call.1} parent=1 // pred_check_branch
      %36 = sbr.rel (0) target = $region13
    $region12: #{tpu_custom_call.1} parent=1 // pred_region
      %s38 = ssub.s32 2048, 2048
      %39 = vsyncadd [#allocation7], %s38
      %s40 = sshll.u32 [#allocation8], 4
      %s41 = int_to_ptr.vmem [resolvable:$true] %s40
      %46 = dma.hbm_to_vmem [thread:$0]  %s2, 2048, %s41, [#allocation7], 128, 128, 8
    $region13: #{tpu_custom_call.1} parent=1 // pred_fallthru
      _
    // Predicated region
    $region14: #{tpu_custom_call.1} parent=1 // pred_check
      _
    $region15: #{tpu_custom_call.1} parent=1 // pred_check_branch
      %48 = sbr.rel (0) target = $region17
    $region16: #{tpu_custom_call.1} parent=1 // pred_region
      %49 = dma.done [#allocation4], 256
    $region17: #{tpu_custom_call.1} parent=1 // pred_fallthru
      _
    // Predicated region
    $region18: #{tpu_custom_call.1} parent=1 // pred_check
      _
    $region19: #{tpu_custom_call.1} parent=1 // pred_check_branch
      %51 = sbr.rel (0) target = $region21
    $region20: #{tpu_custom_call.1} parent=1 // pred_region
      %52 = dma.done [#allocation7], 4096
    $region21: #{tpu_custom_call.1} parent=1 // pred_fallthru
      _
    // Predicated region
    $region22: #{tpu_custom_call.1} parent=1 // pred_check
      _
    $region23: #{tpu_custom_call.1} parent=1 // pred_check_branch
      %54 = sbr.rel (0) target = $region25
    $region24: #{tpu_custom_call.1} parent=1 // pred_region
      %55 = dma.done [#allocation7], 2048
    $region25: #{tpu_custom_call.1} parent=1 // pred_fallthru
      _
    %p56 = scmp.eq.s32.totalorder 0, 0
    // Predicated region
    $region26: #{tpu_custom_call.1} parent=1 // pred_check
      %p57 = pneg %p56
    $region27: #{tpu_custom_call.1} parent=1 // pred_check_branch
      %59 = sbr.rel (%p57) target = $region29
    $region28: #{tpu_custom_call.1} parent=1 // pred_region
      %60 = vst [vmem:[#allocation2] sm:$0xff] 0.0
      %61 = vst [vmem:[#allocation2 + $0x8] sm:$0xff] 0.0
    $region29: #{tpu_custom_call.1} parent=1 // pred_fallthru
      _
    %v62 = vld [vmem:[#allocation3] sm:$0xff]
    %v63 = vld [vmem:[#allocation3 + $0x8] sm:$0xff]
    %v64 = vld [vmem:[#allocation6] sm:$0xff]
    %v65 = vld [vmem:[#allocation6 + $0x8] sm:$0xff]
    %v66 = vld [vmem:[#allocation6 + $0x10] sm:$0xff]
    %v67 = vld [vmem:[#allocation6 + $0x18] sm:$0xff]
    %v68 = vld [vmem:[#allocation6 + $0x20] sm:$0xff]
    %v69 = vld [vmem:[#allocation6 + $0x28] sm:$0xff]
    %v70 = vld [vmem:[#allocation6 + $0x30] sm:$0xff]
    %v71 = vld [vmem:[#allocation6 + $0x38] sm:$0xff]
    %v72 = vld [vmem:[#allocation6 + $0x40] sm:$0xff]
    %v73 = vld [vmem:[#allocation6 + $0x48] sm:$0xff]
    %v74 = vld [vmem:[#allocation6 + $0x50] sm:$0xff]
    %v75 = vld [vmem:[#allocation6 + $0x58] sm:$0xff]
    %v76 = vld [vmem:[#allocation6 + $0x60] sm:$0xff]
    %v77 = vld [vmem:[#allocation6 + $0x68] sm:$0xff]
    %v78 = vld [vmem:[#allocation6 + $0x70] sm:$0xff]
    %v79 = vld [vmem:[#allocation6 + $0x78] sm:$0xff]
    %v80 = vld [vmem:[#allocation6 + $0x80] sm:$0xff]
    %v81 = vld [vmem:[#allocation6 + $0x88] sm:$0xff]
    %v82 = vld [vmem:[#allocation6 + $0x90] sm:$0xff]
    %v83 = vld [vmem:[#allocation6 + $0x98] sm:$0xff]
    %v84 = vld [vmem:[#allocation6 + $0xa0] sm:$0xff]
    %v85 = vld [vmem:[#allocation6 + $0xa8] sm:$0xff]
    %v86 = vld [vmem:[#allocation6 + $0xb0] sm:$0xff]
    %v87 = vld [vmem:[#allocation6 + $0xb8] sm:$0xff]
    %v88 = vld [vmem:[#allocation6 + $0xc0] sm:$0xff]
    %v89 = vld [vmem:[#allocation6 + $0xc8] sm:$0xff]
    %v90 = vld [vmem:[#allocation6 + $0xd0] sm:$0xff]
    %v91 = vld [vmem:[#allocation6 + $0xd8] sm:$0xff]
    %v92 = vld [vmem:[#allocation6 + $0xe0] sm:$0xff]
    %v93 = vld [vmem:[#allocation6 + $0xe8] sm:$0xff]
    %v94 = vld [vmem:[#allocation6 + $0xf0] sm:$0xff]
    %v95 = vld [vmem:[#allocation6 + $0xf8] sm:$0xff]
    %96 = vmatprep.subr.mxu0 %v95
    %97 = vmatpush1.msra.mxu0 %v94
    %98 = vmatprep.subr.mxu0 %v93
    %99 = vmatpush1.msra.mxu0 %v92
    %100 = vmatprep.subr.mxu0 %v91
    %101 = vmatpush1.msra.mxu0 %v90
    %102 = vmatprep.subr.mxu0 %v89
    %103 = vmatpush1.msra.mxu0 %v88
    %104 = vmatprep.subr.mxu0 %v87
    %105 = vmatpush1.msra.mxu0 %v86
    %106 = vmatprep.subr.mxu0 %v85
    %107 = vmatpush1.msra.mxu0 %v84
    %108 = vmatprep.subr.mxu0 %v83
    %109 = vmatpush1.msra.mxu0 %v82
    %110 = vmatprep.subr.mxu0 %v81
    %111 = vmatpush1.msra.mxu0 %v80
    %112 = vmatprep.subr.mxu0 %v79
    %113 = vmatpush1.msra.mxu0 %v78
    %114 = vmatprep.subr.mxu0 %v77
    %115 = vmatpush1.msra.mxu0 %v76
    %116 = vmatprep.subr.mxu0 %v75
    %117 = vmatpush1.msra.mxu0 %v74
    %118 = vmatprep.subr.mxu0 %v73
    %119 = vmatpush1.msra.mxu0 %v72
    %120 = vmatprep.subr.mxu0 %v71
    %121 = vmatpush1.msra.mxu0 %v70
    %122 = vmatprep.subr.mxu0 %v69
    %123 = vmatpush1.msra.mxu0 %v68
    %124 = vmatprep.subr.mxu0 %v67
    %125 = vmatpush1.msra.mxu0 %v66
    %126 = vmatprep.subr.mxu0 %v65
    %127 = vmatpush1.msra.mxu0 %v64
    %128 = vmatprep.subr.mxu0 0.0
    %129 = vmatpush2.msra.mxu0 0.0
    %130 = vmatprep.subr.mxu0 0.0
    %131 = vmatpush2.msra.mxu0 0.0
    %132 = vmatprep.subr.mxu0 0.0
    %133 = vmatpush2.msra.mxu0 0.0
    %134 = vmatprep.subr.mxu0 0.0
    %135 = vmatpush2.msra.mxu0 0.0
    %136 = vmatprep.subr.mxu0 0.0
    %137 = vmatpush2.msra.mxu0 0.0
    %138 = vmatprep.subr.mxu0 0.0
    %139 = vmatpush2.msra.mxu0 0.0
    %140 = vmatprep.subr.mxu0 0.0
    %141 = vmatpush2.msra.mxu0 0.0
    %142 = vmatprep.subr.mxu0 0.0
    %143 = vmatpush2.msra.mxu0 0.0
    %144 = vmatprep.subr.mxu0 0.0
    %145 = vmatpush2.msra.mxu0 0.0
    %146 = vmatprep.subr.mxu0 0.0
    %147 = vmatpush2.msra.mxu0 0.0
    %148 = vmatprep.subr.mxu0 0.0
    %149 = vmatpush2.msra.mxu0 0.0
    %150 = vmatprep.subr.mxu0 0.0
    %151 = vmatpush2.msra.mxu0 0.0
    %152 = vmatprep.subr.mxu0 0.0
    %153 = vmatpush2.msra.mxu0 0.0
    %154 = vmatprep.subr.mxu0 0.0
    %155 = vmatpush2.msra.mxu0 0.0
    %156 = vmatprep.subr.mxu0 0.0
    %157 = vmatpush2.msra.mxu0 0.0
    %158 = vmatprep.subr.mxu0 0.0
    %159 = vmatpush2.msra.mxu0 0.0
    %160 = vmatprep.mubr.f32.mxu0 0.0
    %161 = vmatmul.mubr.f32.gmra.mxu0 %v62
    %v162 = vpop.f32.mrf.mxu0
    %v163 = vadd.f32 0.0, %v162
    %v164 = vpop.f32.mrf.mxu0
    %v165 = vadd.f32 0.0, %v164
    %166 = vmatprep.mubr.f32.mxu0 0.0
    %167 = vmatmul.mubr.f32.gmra.mxu0 %v63
    %v168 = vpop.f32.mrf.mxu0
    %v169 = vadd.f32 0.0, %v168
    %v170 = vpop.f32.mrf.mxu0
    %v171 = vadd.f32 0.0, %v170
    %172 = vdwg.mxu0
    %v173 = vmul.f32 %v165, 0.5
    %v174 = vmul.f32 %v171, 0.5
    %v175 = vmul.f32 %v165, 0.035677407
    %v176 = vmul.f32 %v171, 0.035677407
    %v177 = vmul.f32 %v175, %v165
    %v178 = vmul.f32 %v176, %v171
    %v179 = vadd.f32 %v177, 0.7978846
    %v180 = vadd.f32 %v178, 0.7978846
    %v181 = vmul.f32 %v165, %v179
    %v182 = vmul.f32 %v171, %v180
    %v183 = vtanh.pop %v181
    %v184 = vtanh.pop %v182
    %v185 = vadd.f32 %v183, 1.0
    %v186 = vadd.f32 %v184, 1.0
    %v187 = vmul.f32 %v173, %v185
    %v188 = vmul.f32 %v174, %v186
    %v189 = vmul.f32 %v163, %v187
    %v190 = vmul.f32 %v169, %v188
    %v191 = vld [vmem:[#allocation2] sm:$0xff]
    %v192 = vld [vmem:[#allocation2 + $0x8] sm:$0xff]
    %v193 = vld [vmem:[#allocation8] sm:$0xff]
    %v194 = vld [vmem:[#allocation8 + $0x8] sm:$0xff]
    %v195 = vld [vmem:[#allocation8 + $0x10] sm:$0xff]
    %v196 = vld [vmem:[#allocation8 + $0x18] sm:$0xff]
    %v197 = vld [vmem:[#allocation8 + $0x20] sm:$0xff]
    %v198 = vld [vmem:[#allocation8 + $0x28] sm:$0xff]
    %v199 = vld [vmem:[#allocation8 + $0x30] sm:$0xff]
    %v200 = vld [vmem:[#allocation8 + $0x38] sm:$0xff]
    %v201 = vld [vmem:[#allocation8 + $0x40] sm:$0xff]
    %v202 = vld [vmem:[#allocation8 + $0x48] sm:$0xff]
    %v203 = vld [vmem:[#allocation8 + $0x50] sm:$0xff]
    %v204 = vld [vmem:[#allocation8 + $0x58] sm:$0xff]
    %v205 = vld [vmem:[#allocation8 + $0x60] sm:$0xff]
    %v206 = vld [vmem:[#allocation8 + $0x68] sm:$0xff]
    %v207 = vld [vmem:[#allocation8 + $0x70] sm:$0xff]
    %v208 = vld [vmem:[#allocation8 + $0x78] sm:$0xff]
    %209 = vmatprep.subr.mxu0 0.0
    %210 = vmatpush1.msra.mxu0 %v208
    %211 = vmatprep.subr.mxu0 0.0
    %212 = vmatpush1.msra.mxu0 %v207
    %213 = vmatprep.subr.mxu0 0.0
    %214 = vmatpush1.msra.mxu0 %v206
    %215 = vmatprep.subr.mxu0 0.0
    %216 = vmatpush1.msra.mxu0 %v205
    %217 = vmatprep.subr.mxu0 0.0
    %218 = vmatpush1.msra.mxu0 %v204
    %219 = vmatprep.subr.mxu0 0.0
    %220 = vmatpush1.msra.mxu0 %v203
    %221 = vmatprep.subr.mxu0 0.0
    %222 = vmatpush1.msra.mxu0 %v202
    %223 = vmatprep.subr.mxu0 0.0
    %224 = vmatpush1.msra.mxu0 %v201
    %225 = vmatprep.subr.mxu0 0.0
    %226 = vmatpush1.msra.mxu0 %v200
    %227 = vmatprep.subr.mxu0 0.0
    %228 = vmatpush1.msra.mxu0 %v199
    %229 = vmatprep.subr.mxu0 0.0
    %230 = vmatpush1.msra.mxu0 %v198
    %231 = vmatprep.subr.mxu0 0.0
    %232 = vmatpush1.msra.mxu0 %v197
    %233 = vmatprep.subr.mxu0 0.0
    %234 = vmatpush1.msra.mxu0 %v196
    %235 = vmatprep.subr.mxu0 0.0
    %236 = vmatpush1.msra.mxu0 %v195
    %237 = vmatprep.subr.mxu0 0.0
    %238 = vmatpush1.msra.mxu0 %v194
    %239 = vmatprep.subr.mxu0 0.0
    %240 = vmatpush1.msra.mxu0 %v193
    %241 = vmatprep.subr.mxu0 0.0
    %242 = vmatpush2.msra.mxu0 0.0
    %243 = vmatprep.subr.mxu0 0.0
    %244 = vmatpush2.msra.mxu0 0.0
    %245 = vmatprep.subr.mxu0 0.0
    %246 = vmatpush2.msra.mxu0 0.0
    %247 = vmatprep.subr.mxu0 0.0
    %248 = vmatpush2.msra.mxu0 0.0
    %249 = vmatprep.subr.mxu0 0.0
    %250 = vmatpush2.msra.mxu0 0.0
    %251 = vmatprep.subr.mxu0 0.0
    %252 = vmatpush2.msra.mxu0 0.0
    %253 = vmatprep.subr.mxu0 0.0
    %254 = vmatpush2.msra.mxu0 0.0
    %255 = vmatprep.subr.mxu0 0.0
    %256 = vmatpush2.msra.mxu0 0.0
    %257 = vmatprep.subr.mxu0 0.0
    %258 = vmatpush2.msra.mxu0 0.0
    %259 = vmatprep.subr.mxu0 0.0
    %260 = vmatpush2.msra.mxu0 0.0
    %261 = vmatprep.subr.mxu0 0.0
    %262 = vmatpush2.msra.mxu0 0.0
    %263 = vmatprep.subr.mxu0 0.0
    %264 = vmatpush2.msra.mxu0 0.0
    %265 = vmatprep.subr.mxu0 0.0
    %266 = vmatpush2.msra.mxu0 0.0
    %267 = vmatprep.subr.mxu0 0.0
    %268 = vmatpush2.msra.mxu0 0.0
    %269 = vmatprep.subr.mxu0 0.0
    %270 = vmatpush2.msra.mxu0 0.0
    %271 = vmatprep.subr.mxu0 0.0
    %272 = vmatpush2.msra.mxu0 0.0
    %273 = vmatprep.mubr.f32.mxu0 0.0
    %274 = vmatmul.mubr.f32.gmra.mxu0 %v189
    %v275 = vpop.f32.mrf.mxu0
    %v276 = vadd.f32 0.0, %v275
    %v277 = vpop.f32.mrf.mxu0
    %278 = vmatprep.mubr.f32.mxu0 0.0
    %279 = vmatmul.mubr.f32.gmra.mxu0 %v190
    %v280 = vpop.f32.mrf.mxu0
    %v281 = vadd.f32 0.0, %v280
    %v282 = vpop.f32.mrf.mxu0
    %283 = vdwg.mxu0
    %v284 = vadd.f32 %v191, %v276
    %v285 = vadd.f32 %v192, %v281
    %286 = vst [vmem:[#allocation2] sm:$0xff] %v284
    %287 = vst [vmem:[#allocation2 + $0x8] sm:$0xff] %v285
    // Predicated region
    $region30: #{tpu_custom_call.1} parent=1 // pred_check
      %p288 = pneg %p56
    $region31: #{tpu_custom_call.1} parent=1 // pred_check_branch
      %290 = sbr.rel (%p288) target = $region33
    $region32: #{tpu_custom_call.1} parent=1 // pred_region
      %v291 = vld [vmem:[#allocation2] sm:$0xff]
      %v292 = vld [vmem:[#allocation2 + $0x8] sm:$0xff]
      %293 = vst [vmem:[#allocation9] sm:$0xff] %v291
      %294 = vst [vmem:[#allocation9 + $0x8] sm:$0xff] %v292
    $region33: #{tpu_custom_call.1} parent=1 // pred_fallthru
      _
    // Predicated region
    $region34: #{tpu_custom_call.1} parent=1 // pred_check
      _
    $region35: #{tpu_custom_call.1} parent=1 // pred_check_branch
      %296 = sbr.rel (0) target = $region37
    $region36: #{tpu_custom_call.1} parent=1 // pred_region
      %s298 = ssub.s32 256, 256
      %299 = vsyncadd [#allocation5], %s298
      %s300 = sshll.u32 [#allocation9], 4
      %s301 = int_to_ptr.vmem [resolvable:$true] %s300
      %306 = dma.vmem_to_hbm [thread:$0]  %s301, 256, %s3, [#allocation5], 128, 128, 8
    $region37: #{tpu_custom_call.1} parent=1 // pred_fallthru
      _
    // Predicated region
    $region38: #{tpu_custom_call.1} parent=1 // pred_check
      _
    $region39: #{tpu_custom_call.1} parent=1 // pred_check_branch
      %308 = sbr.rel (0) target = $region41
    $region40: #{tpu_custom_call.1} parent=1 // pred_region
      %309 = dma.done [#allocation5], 256
    $region41: #{tpu_custom_call.1} parent=1 // pred_fallthru
      _
    %310 = vsyncpa [#allocation4], 1
    %311 = vsyncpa [#allocation7], 1
    %312 = vsyncpa [#allocation5], 1

</llo_original>
